<compile_context>
chip_gen: v7x
topology: tpu7x:2x2x1
jax: 0.10.0
libtpu: 0.0.40
codegen_flags: <defaults>
</compile_context>

<pallas_src>
from functools import partial  # noqa: F401  (kept for parity with typical wrappers)

import numpy as np
import jax
import jax.numpy as jnp
from jax.experimental import pallas as pl
from jax.experimental.pallas import tpu as pltpu


# ----------------------------------------------------------------------------
# Pallas kernel
# ----------------------------------------------------------------------------
def _cca_kernel(scalars_ref, seed_ref, q_ref, std_ref, act_ref,
                probs_ref, u_out_ref, packed_ref):
    TB, N = q_ref.shape                       # batch tile, num candidate actions
    A = act_ref.shape[-1]                     # action dim

    exploit_temp = scalars_ref[0]             # SMEM scalars (f32)
    inv_temp = scalars_ref[1]                 # 1 / entropy_temp

    q = q_ref[...].astype(jnp.float32)
    std = std_ref[...].astype(jnp.float32)

    # u = exploit_temp * q + (1 - exploit_temp) * stddev
    u = exploit_temp * q + (1.0 - exploit_temp) * std
    u_max = jnp.max(u, axis=-1, keepdims=True)                       # [TB, 1]

    lane = jax.lax.broadcasted_iota(jnp.int32, (TB, N), 1)
    # argmax(u): first maximal index (matches torch.max tie behavior).
    best_ind = jnp.min(jnp.where(u == u_max, lane, N),
                       axis=-1, keepdims=True)                       # [TB, 1] int32

    # Softmax of u_logits / temp. Its row-max is 0 by construction, and a
    # scalar actions_log_prob is a uniform shift that cancels -> no extra
    # row-max pass, no "+ alp".
    e = jnp.exp((u - u_max) * inv_temp)                              # [TB, N]
    row_sum = jnp.sum(e, axis=-1, keepdims=True)
    probs = e * (1.0 / row_sum)

    # One categorical draw via the exponential race: argmin_i E_i / p_i with
    # E_i ~ Exp(1). Uniform bits from a counter hash keyed on
    # (seed, global row, lane) so every grid block gets distinct noise.
    row = jax.lax.broadcasted_iota(jnp.int32, (TB, N), 0) + pl.program_id(0) * TB
    ctr = (row * N + lane).astype(jnp.uint32)
    x = ctr + seed_ref[0].astype(jnp.uint32) * np.uint32(0x9E3779B9)
    x = x ^ (x >> 16)
    x = x * np.uint32(0x7FEB352D)
    x = x ^ (x >> 15)
    x = x * np.uint32(0x846CA68B)
    x = x ^ (x >> 16)
    u01 = (x >> 8).astype(jnp.float32) * (1.0 / (1 << 24))           # [0, 1)
    expo = -jnp.log(u01 + 1e-20)                                     # Exp(1) draws
    score = expo / e                                                 # reuse softmax numerator
    s_min = jnp.min(score, axis=-1, keepdims=True)
    samp_ind = jnp.min(jnp.where(score == s_min, lane, N),
                       axis=-1, keepdims=True)                       # [TB, 1] int32

    # Gather actions with one-hot * sublane reduce (no dynamic gather on TPU).
    acts = act_ref[...].astype(jnp.float32)                          # [TB, N, A]
    best_act = jnp.sum((lane == best_ind).astype(jnp.float32)[:, :, None] * acts,
                       axis=1)                                       # [TB, A]
    samp_act = jnp.sum((lane == samp_ind).astype(jnp.float32)[:, :, None] * acts,
                       axis=1)                                       # [TB, A]

    probs_ref[...] = probs
    u_out_ref[...] = u

    # Pack the narrow per-row outputs into one lane-dense 128-wide f32 slab:
    # [best_u | best_ind | sample_ind | best_act (A) | sample_act (A) | zeros].
    # Indices are small ints, exactly representable in f32.
    pieces = [u_max,
              best_ind.astype(jnp.float32),
              samp_ind.astype(jnp.float32),
              best_act,
              samp_act]
    pad_w = packed_ref.shape[-1] - (3 + 2 * A)
    if pad_w > 0:
        pieces.append(jnp.broadcast_to(0.0 * u_max, (TB, pad_w)))
    packed_ref[...] = jnp.concatenate(pieces, axis=-1)


# ----------------------------------------------------------------------------
# Utils.schedule analogue: number -> constant, (init, final, duration) -> linear
# ----------------------------------------------------------------------------
def _schedule(sched, step):
    if isinstance(sched, (tuple, list)):
        if step is None:
            return float(sched[0])
        init, final, duration = sched
        mix = jnp.clip(jnp.asarray(step, jnp.float32) / duration, 0.0, 1.0)
        return (1.0 - mix) * init + mix * final
    return float(sched)


def _pick_batch_tile(batch):
    """Largest batch tile <= 1024 that is a multiple of 8 and divides B; a
    single full block otherwise (full-array blocks are always legal)."""
    if batch <= 1024:
        return batch
    for tb in range(1024, 7, -8):
        if batch % tb == 0:
            return tb
    return batch


# ----------------------------------------------------------------------------
# Wrapper
# ----------------------------------------------------------------------------
def categorical_critic_actor_forward(q_mean, q_stddev, actions, *,
                                     step=None, entropy_sched=1.0,
                                     exploit_temp=1.0, actions_log_prob=0.0,
                                     sample_q=False, seed=0):
    """q_mean, q_stddev: [B, N] Q-value statistics over N candidate actions.
    actions (Q.action): [B, N, A]. Returns a dict materializing the Q_Pi
    distribution's attributes."""
    # TODO(synk): sample_q=True needs Q.rsample() of the (unknown) source
    # distribution class; only the default Q.mean path is implemented.
    assert not sample_q, "sample_q=True has no Pallas equivalent here"
    # TODO(synk): tensor-valued actions_log_prob not wired through; a scalar is
    # a uniform logit shift and provably cancels in probs / argmax / sampling.
    del actions_log_prob

    B, N = q_mean.shape
    A = actions.shape[-1]
    assert 3 + 2 * A <= 128, "packed output slab assumes action dim A <= 62"

    entropy_temp = jnp.asarray(_schedule(entropy_sched, step), jnp.float32)
    scalars = jnp.stack([jnp.asarray(exploit_temp, jnp.float32),
                         1.0 / entropy_temp])
    seed_arr = jnp.asarray([seed], jnp.int32)

    TB = _pick_batch_tile(B)
    grid = (B // TB,)

    probs, u, packed = pl.pallas_call(
        _cca_kernel,
        grid=grid,
        out_shape=(
            jax.ShapeDtypeStruct((B, N), jnp.float32),      # probs
            jax.ShapeDtypeStruct((B, N), jnp.float32),      # u
            jax.ShapeDtypeStruct((B, 128), jnp.float32),    # packed narrow outputs
        ),
        in_specs=[
            pl.BlockSpec(memory_space=pltpu.MemorySpace.SMEM),      # scalars
            pl.BlockSpec(memory_space=pltpu.MemorySpace.SMEM),      # seed
            pl.BlockSpec((TB, N), lambda i: (i, 0)),                # q mean
            pl.BlockSpec((TB, N), lambda i: (i, 0)),                # q stddev
            pl.BlockSpec((TB, N, A), lambda i: (i, 0, 0)),          # actions
        ],
        out_specs=(
            pl.BlockSpec((TB, N), lambda i: (i, 0)),
            pl.BlockSpec((TB, N), lambda i: (i, 0)),
            pl.BlockSpec((TB, 128), lambda i: (i, 0)),
        ),
        compiler_params=pltpu.CompilerParams(
            dimension_semantics=("parallel",)),
    )(scalars, seed_arr, q_mean, q_stddev, actions)

    best_u = packed[:, 0]
    best_ind = packed[:, 1].astype(jnp.int32)
    sample_ind = packed[:, 2].astype(jnp.int32)
    best = packed[:, 3:3 + A]
    sample = packed[:, 3 + A:3 + 2 * A]

    # Q_Pi attributes materialized; inputs the caller already has (q, actions)
    # are passed through, not copied through the kernel.
    return {
        'probs': probs,
        'u': u,
        'best_u': best_u,
        'best_ind': best_ind,
        'best': best,
        'sample_ind': sample_ind,
        'sample': sample,            # one materialized categorical draw
        'q': q_mean,
        'actions': actions,
        'entropy_temp': entropy_temp,
    }


# ----------------------------------------------------------------------------
# Demo + correctness check vs. pure-JAX reference
# ----------------------------------------------------------------------------
if __name__ == "__main__":
    key = jax.random.PRNGKey(0)
    kq, ks, ka = jax.random.split(key, 3)

    B, N, A = 8, 8, 4        # batch, candidate actions (ensemble), action dim
    q_mean = jax.random.normal(kq, (B, N), jnp.float32)
    q_std = jax.random.uniform(ks, (B, N), jnp.float32, minval=0.05, maxval=0.5)
    actions = jax.random.uniform(ka, (B, N, A), jnp.float32, minval=-1.0, maxval=1.0)

    step = 1000
    entropy_sched = (1.0, 0.1, 20000.0)
    exploit_temp = 0.9
    alp = 0.0

    out = categorical_critic_actor_forward(
        q_mean, q_std, actions,
        step=step, entropy_sched=entropy_sched,
        exploit_temp=exploit_temp, actions_log_prob=alp, seed=42)
    jax.block_until_ready(out)

    # Pure-JAX reference of the forward pass.
    temp = _schedule(entropy_sched, step)
    u_ref = exploit_temp * q_mean + (1.0 - exploit_temp) * q_std
    logits_ref = (u_ref - u_ref.max(-1, keepdims=True)) / temp + alp
    probs_ref = jax.nn.softmax(logits_ref, axis=-1)
    best_ind_ref = jnp.argmax(u_ref, axis=-1).astype(jnp.int32)
    best_u_ref = u_ref.max(-1)
    best_act_ref = jnp.take_along_axis(actions, best_ind_ref[:, None, None],
                                       axis=1)[:, 0, :]

    assert jnp.allclose(out['u'], u_ref, atol=1e-5, rtol=1e-5)
    assert jnp.allclose(out['probs'], probs_ref, atol=1e-5, rtol=1e-5)
    assert jnp.allclose(out['probs'].sum(-1), 1.0, atol=1e-5)
    assert jnp.allclose(out['best_u'], best_u_ref, atol=1e-5, rtol=1e-5)
    assert jnp.array_equal(out['best_ind'], best_ind_ref)
    assert jnp.allclose(out['best'], best_act_ref, atol=1e-6)

    # Sample self-consistency: index in range and gathered action matches it.
    si = out['sample_ind']
    assert bool(jnp.all((si >= 0) & (si < N)))
    samp_act_ref = jnp.take_along_axis(actions, si[:, None, None], axis=1)[:, 0, :]
    assert jnp.allclose(out['sample'], samp_act_ref, atol=1e-6)

    print("KERNEL_OK")
</pallas_src>

<mosaic_0001>
module attributes {stable_mosaic.version = 11 : i64} {
  func.func @_cca_kernel(%arg0: i32, %arg1: memref<2xf32, #tpu.memory_space<smem>>, %arg2: memref<1xi32, #tpu.memory_space<smem>>, %arg3: memref<8x8xf32, #tpu.memory_space<vmem>>, %arg4: memref<8x8xf32, #tpu.memory_space<vmem>>, %arg5: memref<8x8x4xf32, #tpu.memory_space<vmem>>, %arg6: memref<8x8xf32, #tpu.memory_space<vmem>>, %arg7: memref<8x8xf32, #tpu.memory_space<vmem>>, %arg8: memref<8x128xf32, #tpu.memory_space<vmem>>) attributes {dimension_semantics = [#tpu.dimension_semantics<parallel>], iteration_bounds = array<i64: 1>, scalar_prefetch = 0 : i64, scratch_operands = 0 : i64, tpu.core_type = #tpu.core_type<tc>, window_params = [{transform_indices = @transform_0, window_bounds = array<i64: 2>}, {transform_indices = @transform_1, window_bounds = array<i64: 1>}, {transform_indices = @transform_2, window_bounds = array<i64: 8, 8>}, {transform_indices = @transform_3, window_bounds = array<i64: 8, 8>}, {transform_indices = @transform_4, window_bounds = array<i64: 8, 8, 4>}, {transform_indices = @transform_5, window_bounds = array<i64: 8, 8>}, {transform_indices = @transform_6, window_bounds = array<i64: 8, 8>}, {transform_indices = @transform_7, window_bounds = array<i64: 8, 128>}]} {
    %c0 = arith.constant 0 : index
    %0 = memref.load %arg1[%c0] : memref<2xf32, #tpu.memory_space<smem>>
    %c1 = arith.constant 1 : index
    %1 = memref.load %arg1[%c1] : memref<2xf32, #tpu.memory_space<smem>>
    %c0_0 = arith.constant 0 : index
    %c0_1 = arith.constant 0 : index
    %2 = vector.load %arg3[%c0_0, %c0_1] : memref<8x8xf32, #tpu.memory_space<vmem>>, vector<8x8xf32>
    %c0_2 = arith.constant 0 : index
    %c0_3 = arith.constant 0 : index
    %3 = vector.load %arg4[%c0_2, %c0_3] : memref<8x8xf32, #tpu.memory_space<vmem>>, vector<8x8xf32>
    %4 = vector.broadcast %0 : f32 to vector<8x8xf32>
    %5 = arith.mulf %4, %2 : vector<8x8xf32>
    %cst = arith.constant 1.000000e+00 : f32
    %6 = arith.subf %cst, %0 : f32
    %7 = vector.broadcast %6 : f32 to vector<8x8xf32>
    %8 = arith.mulf %7, %3 : vector<8x8xf32>
    %9 = arith.addf %5, %8 : vector<8x8xf32>
    %cst_4 = arith.constant dense<0xFF800000> : vector<8xf32>
    %10 = vector.multi_reduction <maximumf>, %9, %cst_4 [1] : vector<8x8xf32> to vector<8xf32>
    %11 = vector.shape_cast %10 : vector<8xf32> to vector<8x1xf32>
    %12 = tpu.iota {dimensions = array<i32: 1>} : vector<8x8xi32>
    %13 = vector.broadcast %11 : vector<8x1xf32> to vector<8x8xf32>
    %14 = arith.cmpf oeq, %9, %13 : vector<8x8xf32>
    %c8_i32 = arith.constant 8 : i32
    %15 = vector.broadcast %c8_i32 : i32 to vector<8x8xi32>
    %16 = arith.select %14, %12, %15 : vector<8x8xi1>, vector<8x8xi32>
    %cst_5 = arith.constant dense<2147483647> : vector<8xi32>
    %17 = vector.multi_reduction <minsi>, %16, %cst_5 [1] : vector<8x8xi32> to vector<8xi32>
    %18 = vector.shape_cast %17 : vector<8xi32> to vector<8x1xi32>
    %19 = vector.broadcast %11 : vector<8x1xf32> to vector<8x8xf32>
    %20 = arith.subf %9, %19 : vector<8x8xf32>
    %21 = vector.broadcast %1 : f32 to vector<8x8xf32>
    %22 = arith.mulf %20, %21 : vector<8x8xf32>
    %23 = math.exp %22 : vector<8x8xf32>
    %cst_6 = arith.constant dense<0.000000e+00> : vector<8xf32>
    %24 = vector.multi_reduction <add>, %23, %cst_6 [1] : vector<8x8xf32> to vector<8xf32>
    %25 = vector.shape_cast %24 : vector<8xf32> to vector<8x1xf32>
    %cst_7 = arith.constant 1.000000e+00 : f32
    %26 = vector.broadcast %cst_7 : f32 to vector<8x1xf32>
    %27 = arith.divf %26, %25 : vector<8x1xf32>
    %28 = vector.broadcast %27 : vector<8x1xf32> to vector<8x8xf32>
    %29 = arith.mulf %23, %28 : vector<8x8xf32>
    %30 = tpu.iota {dimensions = array<i32: 0>} : vector<8x8xi32>
    %c8_i32_8 = arith.constant 8 : i32
    %31 = arith.muli %arg0, %c8_i32_8 : i32
    %32 = vector.broadcast %31 : i32 to vector<8x8xi32>
    %33 = arith.addi %30, %32 : vector<8x8xi32>
    %c8_i32_9 = arith.constant 8 : i32
    %34 = vector.broadcast %c8_i32_9 : i32 to vector<8x8xi32>
    %35 = arith.muli %33, %34 : vector<8x8xi32>
    %36 = arith.addi %35, %12 : vector<8x8xi32>
    %c0_10 = arith.constant 0 : index
    %37 = memref.load %arg2[%c0_10] : memref<1xi32, #tpu.memory_space<smem>>
    %c-1640531527_i32 = arith.constant -1640531527 : i32
    %38 = arith.muli %37, %c-1640531527_i32 : i32
    %39 = vector.broadcast %38 : i32 to vector<8x8xi32>
    %40 = arith.addi %36, %39 : vector<8x8xi32>
    %c16_i32 = arith.constant 16 : i32
    %41 = vector.broadcast %c16_i32 : i32 to vector<8x8xi32>
    %42 = arith.shrui %40, %41 : vector<8x8xi32>
    %43 = arith.xori %40, %42 : vector<8x8xi32>
    %c2146121005_i32 = arith.constant 2146121005 : i32
    %44 = vector.broadcast %c2146121005_i32 : i32 to vector<8x8xi32>
    %45 = arith.muli %43, %44 : vector<8x8xi32>
    %c15_i32 = arith.constant 15 : i32
    %46 = vector.broadcast %c15_i32 : i32 to vector<8x8xi32>
    %47 = arith.shrui %45, %46 : vector<8x8xi32>
    %48 = arith.xori %45, %47 : vector<8x8xi32>
    %c-2073254261_i32 = arith.constant -2073254261 : i32
    %49 = vector.broadcast %c-2073254261_i32 : i32 to vector<8x8xi32>
    %50 = arith.muli %48, %49 : vector<8x8xi32>
    %c16_i32_11 = arith.constant 16 : i32
    %51 = vector.broadcast %c16_i32_11 : i32 to vector<8x8xi32>
    %52 = arith.shrui %50, %51 : vector<8x8xi32>
    %53 = arith.xori %50, %52 : vector<8x8xi32>
    %c8_i32_12 = arith.constant 8 : i32
    %54 = vector.broadcast %c8_i32_12 : i32 to vector<8x8xi32>
    %55 = arith.shrui %53, %54 : vector<8x8xi32>
    %56 = arith.uitofp %55 : vector<8x8xi32> to vector<8x8xf32>
    %cst_13 = arith.constant 5.96046448E-8 : f32
    %57 = vector.broadcast %cst_13 : f32 to vector<8x8xf32>
    %58 = arith.mulf %56, %57 : vector<8x8xf32>
    %cst_14 = arith.constant 9.99999968E-21 : f32
    %59 = vector.broadcast %cst_14 : f32 to vector<8x8xf32>
    %60 = arith.addf %58, %59 : vector<8x8xf32>
    %61 = math.log %60 : vector<8x8xf32>
    %cst_15 = arith.constant 0.000000e+00 : f32
    %62 = vector.broadcast %cst_15 : f32 to vector<8x8xf32>
    %63 = arith.subf %62, %61 : vector<8x8xf32>
    %64 = arith.divf %63, %23 : vector<8x8xf32>
    %cst_16 = arith.constant dense<0x7F800000> : vector<8xf32>
    %65 = vector.multi_reduction <minimumf>, %64, %cst_16 [1] : vector<8x8xf32> to vector<8xf32>
    %66 = vector.shape_cast %65 : vector<8xf32> to vector<8x1xf32>
    %67 = vector.broadcast %66 : vector<8x1xf32> to vector<8x8xf32>
    %68 = arith.cmpf oeq, %64, %67 : vector<8x8xf32>
    %c8_i32_17 = arith.constant 8 : i32
    %69 = vector.broadcast %c8_i32_17 : i32 to vector<8x8xi32>
    %70 = arith.select %68, %12, %69 : vector<8x8xi1>, vector<8x8xi32>
    %cst_18 = arith.constant dense<2147483647> : vector<8xi32>
    %71 = vector.multi_reduction <minsi>, %70, %cst_18 [1] : vector<8x8xi32> to vector<8xi32>
    %72 = vector.shape_cast %71 : vector<8xi32> to vector<8x1xi32>
    %c0_19 = arith.constant 0 : index
    %c0_20 = arith.constant 0 : index
    %c0_21 = arith.constant 0 : index
    %73 = vector.load %arg5[%c0_19, %c0_20, %c0_21] : memref<8x8x4xf32, #tpu.memory_space<vmem>>, vector<8x8x4xf32>
    %74 = vector.broadcast %18 : vector<8x1xi32> to vector<8x8xi32>
    %75 = arith.cmpi eq, %12, %74 : vector<8x8xi32>
    %76 = arith.extui %75 : vector<8x8xi1> to vector<8x8xi32>
    %77 = arith.sitofp %76 : vector<8x8xi32> to vector<8x8xf32>
    %78 = vector.shape_cast %77 : vector<8x8xf32> to vector<8x8x1xf32>
    %79 = vector.broadcast %78 : vector<8x8x1xf32> to vector<8x8x4xf32>
    %80 = arith.mulf %79, %73 : vector<8x8x4xf32>
    %cst_22 = arith.constant dense<0.000000e+00> : vector<8x4xf32>
    %81 = vector.multi_reduction <add>, %80, %cst_22 [1] : vector<8x8x4xf32> to vector<8x4xf32>
    %82 = vector.broadcast %72 : vector<8x1xi32> to vector<8x8xi32>
    %83 = arith.cmpi eq, %12, %82 : vector<8x8xi32>
    %84 = arith.extui %83 : vector<8x8xi1> to vector<8x8xi32>
    %85 = arith.sitofp %84 : vector<8x8xi32> to vector<8x8xf32>
    %86 = vector.shape_cast %85 : vector<8x8xf32> to vector<8x8x1xf32>
    %87 = vector.broadcast %86 : vector<8x8x1xf32> to vector<8x8x4xf32>
    %88 = arith.mulf %87, %73 : vector<8x8x4xf32>
    %cst_23 = arith.constant dense<0.000000e+00> : vector<8x4xf32>
    %89 = vector.multi_reduction <add>, %88, %cst_23 [1] : vector<8x8x4xf32> to vector<8x4xf32>
    %c0_24 = arith.constant 0 : index
    %c0_25 = arith.constant 0 : index
    %90 = vector.load %arg6[%c0_24, %c0_25] : memref<8x8xf32, #tpu.memory_space<vmem>>, vector<8x8xf32>
    tpu.vector_store %arg6[%c0_24, %c0_25], %29 {strides = array<i32>} : memref<8x8xf32, #tpu.memory_space<vmem>>, vector<8x8xf32>,
    %c0_26 = arith.constant 0 : index
    %c0_27 = arith.constant 0 : index
    %91 = vector.load %arg7[%c0_26, %c0_27] : memref<8x8xf32, #tpu.memory_space<vmem>>, vector<8x8xf32>
    tpu.vector_store %arg7[%c0_26, %c0_27], %9 {strides = array<i32>} : memref<8x8xf32, #tpu.memory_space<vmem>>, vector<8x8xf32>,
    %92 = arith.sitofp %18 : vector<8x1xi32> to vector<8x1xf32>
    %93 = arith.sitofp %72 : vector<8x1xi32> to vector<8x1xf32>
    %cst_28 = arith.constant 0.000000e+00 : f32
    %94 = vector.broadcast %cst_28 : f32 to vector<8x1xf32>
    %95 = arith.mulf %94, %11 : vector<8x1xf32>
    %96 = vector.shape_cast %95 : vector<8x1xf32> to vector<8x1xf32>
    %97 = vector.broadcast %96 : vector<8x1xf32> to vector<8x117xf32>
    %98 = tpu.concatenate %11, %92, %93, %81, %89, %97 in 1 : vector<8x1xf32>, vector<8x1xf32>, vector<8x1xf32>, vector<8x4xf32>, vector<8x4xf32>, vector<8x117xf32> -> vector<8x128xf32>
    %c0_29 = arith.constant 0 : index
    %c0_30 = arith.constant 0 : index
    %99 = vector.load %arg8[%c0_29, %c0_30] : memref<8x128xf32, #tpu.memory_space<vmem>>, vector<8x128xf32>
    tpu.vector_store %arg8[%c0_29, %c0_30], %98 {strides = array<i32>} : memref<8x128xf32, #tpu.memory_space<vmem>>, vector<8x128xf32>,
    return
  }
  func.func @transform_0(%arg0: i32) -> i32 {
    %c0_i32 = arith.constant 0 : i32
    %c0_i32_0 = arith.constant 0 : i32
    return %c0_i32 : i32
  }
  func.func @transform_1(%arg0: i32) -> i32 {
    %c0_i32 = arith.constant 0 : i32
    %c0_i32_0 = arith.constant 0 : i32
    return %c0_i32 : i32
  }
  func.func @transform_2(%arg0: i32) -> (i32, i32) {
    %c0_i32 = arith.constant 0 : i32
    %c0_i32_0 = arith.constant 0 : i32
    return %arg0, %c0_i32 : i32, i32
  }
  func.func @transform_3(%arg0: i32) -> (i32, i32) {
    %c0_i32 = arith.constant 0 : i32
    %c0_i32_0 = arith.constant 0 : i32
    return %arg0, %c0_i32 : i32, i32
  }
  func.func @transform_4(%arg0: i32) -> (i32, i32, i32) {
    %c0_i32 = arith.constant 0 : i32
    %c0_i32_0 = arith.constant 0 : i32
    %c0_i32_1 = arith.constant 0 : i32
    return %arg0, %c0_i32, %c0_i32_0 : i32, i32, i32
  }
  func.func @transform_5(%arg0: i32) -> (i32, i32) {
    %c0_i32 = arith.constant 0 : i32
    %c0_i32_0 = arith.constant 0 : i32
    return %arg0, %c0_i32 : i32, i32
  }
  func.func @transform_6(%arg0: i32) -> (i32, i32) {
    %c0_i32 = arith.constant 0 : i32
    %c0_i32_0 = arith.constant 0 : i32
    return %arg0, %c0_i32 : i32, i32
  }
  func.func @transform_7(%arg0: i32) -> (i32, i32) {
    %c0_i32 = arith.constant 0 : i32
    %c0_i32_0 = arith.constant 0 : i32
    return %arg0, %c0_i32 : i32, i32
  }
}

</mosaic_0001>

<llo_original>
// kernel: tpu_custom_call.1
$region0: #{tpu_custom_call.1}
  #allocation0 [shape = 'u32[]', space=smem, size = 0x4, offset = 0x4, fixed_abs, tag = 'smem constant byte address 0x4 - core index']
  #allocation1 [shape = 'u32[144,128]{1,0:T(1,128)}', space=vmem, size = 0x12000, scoped, tag = 'internal scratch']
  #allocation2 [shape = 's32[1]{0:T(128)S(6)}', space=smem, size = 0x200, scoped, tag = 'scoped memory for tpu_custom_call.1']
  %s0 = inlined_call_operand.vmem [shape: f32[2], index: 0, kind: input, shape index: {}]
  %s1 = inlined_call_operand.<no memory space> [shape: s32[1], index: 1, kind: input, shape index: {}]
  %s2 = inlined_call_operand.vmem [shape: f32[8,8], index: 2, kind: input, shape index: {}]
  %s3 = inlined_call_operand.vmem [shape: f32[8,8], index: 3, kind: input, shape index: {}]
  %s4 = inlined_call_operand.vmem [shape: f32[8,8,4], index: 4, kind: input, shape index: {}]
  %s5 = inlined_call_operand.hbm [shape: f32[8,8], index: 5, kind: output, shape index: {0}]
  %s6 = inlined_call_operand.hbm [shape: f32[8,8], index: 6, kind: output, shape index: {1}]
  %s7 = inlined_call_operand.hbm [shape: f32[8,128], index: 7, kind: output, shape index: {2}]
  %8 = xla_tuple %s5, %s6, %s7
  %s9 = sld [smem:[#allocation0]]
  $region50: #{tpu_custom_call.1} parent=0
    _
  %s11 = ssub.s32 1, %s9
  %s12 = scalar_select 0, %s11, %s9
  %13 = sst [smem:[#allocation2]] %s1
  $region1: #{tpu_custom_call.1} parent=0
    #allocation3 [shape = 'u8[512]{0}', space=smem, size = 0x200, scoped, tag = 'input window, operand 0, single buffered']
    #allocation4 [shape = 's32[1]{0}', space=sflag, size = 0x4, scoped, tag = 'scoped memory for tpu_custom_call.1']
    #allocation5 [shape = 's32[1]{0}', space=sflag, size = 0x4, scoped, tag = 'scoped memory for tpu_custom_call.1']
    #allocation6 [shape = 'u8[4096]{0}', space=vmem, size = 0x1000, scoped, tag = 'output window, operand 0, single buffered']
    #allocation7 [shape = 'u8[4096]{0}', space=vmem, size = 0x1000, scoped, tag = 'output window, operand 1, single buffered']
    #allocation8 [shape = 's32[1]{0}', space=sflag, size = 0x4, scoped, tag = 'scoped memory for tpu_custom_call.1']
    #allocation9 [shape = 'u8[4096]{0}', space=vmem, size = 0x1000, scoped, tag = 'output window, operand 2, single buffered']
    %14 = vsyncpa [#allocation5], 0
    %15 = vsyncpa [#allocation4], 0
    %16 = vsyncpa [#allocation8], 0
    // Predicated region
    $region2: #{tpu_custom_call.1} parent=1 // pred_check
      _
    $region3: #{tpu_custom_call.1} parent=1 // pred_check_branch
      %18 = sbr.rel (0) target = $region5
    $region4: #{tpu_custom_call.1} parent=1 // pred_region
      %s20 = ssub.s32 16, 16
      %21 = vsyncadd [#allocation5], %s20
      %s23 = sshll.u32 %s0, 4
      %s24 = int_to_ptr.vmem [resolvable:$true] %s23
      %26 = dma.vmem_to_smem %s24, 16, [#allocation3], [#allocation5]
    $region5: #{tpu_custom_call.1} parent=1 // pred_fallthru
      _
    // Predicated region
    $region6: #{tpu_custom_call.1} parent=1 // pred_check
      _
    $region7: #{tpu_custom_call.1} parent=1 // pred_check_branch
      %28 = sbr.rel (0) target = $region9
    $region8: #{tpu_custom_call.1} parent=1 // pred_region
      _
    $region9: #{tpu_custom_call.1} parent=1 // pred_fallthru
      _
    // Predicated region
    $region10: #{tpu_custom_call.1} parent=1 // pred_check
      _
    $region11: #{tpu_custom_call.1} parent=1 // pred_check_branch
      %30 = sbr.rel (0) target = $region13
    $region12: #{tpu_custom_call.1} parent=1 // pred_region
      _
    $region13: #{tpu_custom_call.1} parent=1 // pred_fallthru
      _
    // Predicated region
    $region14: #{tpu_custom_call.1} parent=1 // pred_check
      _
    $region15: #{tpu_custom_call.1} parent=1 // pred_check_branch
      %32 = sbr.rel (0) target = $region17
    $region16: #{tpu_custom_call.1} parent=1 // pred_region
      _
    $region17: #{tpu_custom_call.1} parent=1 // pred_fallthru
      _
    // Predicated region
    $region18: #{tpu_custom_call.1} parent=1 // pred_check
      _
    $region19: #{tpu_custom_call.1} parent=1 // pred_check_branch
      %34 = sbr.rel (0) target = $region21
    $region20: #{tpu_custom_call.1} parent=1 // pred_region
      _
    $region21: #{tpu_custom_call.1} parent=1 // pred_fallthru
      _
    // Predicated region
    $region22: #{tpu_custom_call.1} parent=1 // pred_check
      _
    $region23: #{tpu_custom_call.1} parent=1 // pred_check_branch
      %36 = sbr.rel (0) target = $region25
    $region24: #{tpu_custom_call.1} parent=1 // pred_region
      %37 = dma.done [#allocation5], 16
    $region25: #{tpu_custom_call.1} parent=1 // pred_fallthru
      _
    %38 = sfence
    %s39 = sld [smem:[#allocation3]]
    %s40 = sld [smem:[#allocation3 + $0x1]]
    %v41 = vld [vmem:[%s2] sm:$0xff]
    %v42 = vld [vmem:[%s3] sm:$0xff]
    %v43 = vstv %s39
    %v44 = vmul.f32 %v43, %v41
    %s45 = ssub.f32 1.0, %s39
    %v46 = vstv %s45
    %v47 = vmul.f32 %v46, %v42
    %v48 = vadd.f32 %v44, %v47
    %vm49 = vcmask 64512
    %v50 = vsel %vm49, %v48, -inf
    %51 = vmax.xlane.f32.xlu0 %v50
    %v52 = vpop.xlane.xlu0 %51
    %v53 = vlaneseq
    %v54 = vand.u32 %v53, 127
    %vm55 = vcmp.eq.f32.partialorder %v48, %v52
    %v56 = vsel %vm55, %v54, 8
    %v57 = vsel %vm49, %v56, 2147483647
    %v58 = vand.u32 %v57, 65535
    %v59 = vshra.s32 %v57, 16
    %v60 = vcvt.s32.f32 %v58
    %v61 = vcvt.s32.f32 %v59
    %62 = vmin.xlane.f32.xlu0 %v61
    %v63 = vpop.xlane.xlu0 %62
    %vm64 = vcmp.eq.f32.partialorder %v61, %v63
    %v65 = vsel %vm64, %v60, inf
    %66 = vmin.xlane.f32.xlu0 %v65
    %v67 = vpop.xlane.xlu0 %66
    %v68 = vcvt.f32.s32 %v67
    %v69 = vcvt.f32.s32 %v63
    %v70 = vshll.u32 %v69, 16
    %v71 = vadd.s32 %v70, %v68
    %v72 = vsub.f32 %v48, %v52
    %v73 = vstv %s40
    %v74 = vmul.f32 %v72, %v73
    %v75 = vmul.f32 %v74, 1.442695
    %v76 = vpow.pop %v75
    %v77 = vsel %vm49, %v76, 0.0
    %78 = vadd.xlane.f32.xlu0 %v77
    %v79 = vpop.xlane.xlu0 %78
    %v80 = vrcp.pop %v79
    %v81 = vmul.f32 1.0, %v80
    %v82 = vmul.f32 %v76, %v81
    %v83 = vlaneseq
    %v84 = vshrl.u32 %v83, 7
    %s85 = smul.u32 0, 8
    %v86 = vstv %s85
    %v87 = vadd.s32 %v84, %v86
    %v88 = vmul.u32 %v87, 8
    %v89 = vadd.s32 %v88, %v54
    %s90 = sld [smem:[#allocation2]]
    %s91 = smul.u32 %s90, 2654435769
    %v92 = vstv %s91
    %v93 = vadd.s32 %v89, %v92
    %v94 = vshrl.u32 %v93, 16
    %v95 = vxor.u32 %v93, %v94
    %v96 = vmul.u32 %v95, 2146121005
    %v97 = vshrl.u32 %v96, 15
    %v98 = vxor.u32 %v96, %v97
    %v99 = vmul.u32 %v98, 2221713035
    %v100 = vshrl.u32 %v99, 16
    %v101 = vxor.u32 %v99, %v100
    %v102 = vshrl.u32 %v101, 8
    %v103 = vshrl.u32 %v102, 16
    %v104 = vand.u32 %v102, 65535
    %v105 = vcvt.s32.f32 %v103
    %v106 = vmul.f32 %v105, 65536.0
    %v107 = vcvt.s32.f32 %v104
    %v108 = vadd.f32 %v106, %v107
    %v109 = vmul.f32 %v108, 5.9604645e-08
    %v110 = vadd.f32 %v109, 1e-20
    %v111 = vlog2.pop %v110
    %v112 = vmul.f32 %v111, 0.6931472
    %v113 = vsub.f32 0.0, %v112
    %v114 = vrcp.pop %v76
    %v115 = vmul.f32 %v113, %v114
    %v116 = vsel %vm49, %v115, inf
    %117 = vmin.xlane.f32.xlu0 %v116
    %v118 = vpop.xlane.xlu0 %117
    %vm119 = vcmp.eq.f32.partialorder %v115, %v118
    %v120 = vsel %vm119, %v54, 8
    %v121 = vsel %vm49, %v120, 2147483647
    %v122 = vand.u32 %v121, 65535
    %v123 = vshra.s32 %v121, 16
    %v124 = vcvt.s32.f32 %v122
    %v125 = vcvt.s32.f32 %v123
    %126 = vmin.xlane.f32.xlu0 %v125
    %v127 = vpop.xlane.xlu0 %126
    %vm128 = vcmp.eq.f32.partialorder %v125, %v127
    %v129 = vsel %vm128, %v124, inf
    %130 = vmin.xlane.f32.xlu0 %v129
    %v131 = vpop.xlane.xlu0 %130
    %v132 = vcvt.f32.s32 %v131
    %v133 = vcvt.f32.s32 %v127
    %v134 = vshll.u32 %v133, 16
    %v135 = vadd.s32 %v134, %v132
    %v136 = vld [vmem:[%s4] sm:$0xff]
    %v137 = vld [vmem:[%s4 + $0x8] sm:$0xff]
    %v138 = vld [vmem:[%s4 + $0x10] sm:$0xff]
    %v139 = vld [vmem:[%s4 + $0x18] sm:$0xff]
    %v140 = vld [vmem:[%s4 + $0x20] sm:$0xff]
    %v141 = vld [vmem:[%s4 + $0x28] sm:$0xff]
    %v142 = vld [vmem:[%s4 + $0x30] sm:$0xff]
    %v143 = vld [vmem:[%s4 + $0x38] sm:$0xff]
    %vm144 = vcmp.eq.s32.totalorder %v54, %v71
    %v145 = vsel %vm144, 1, 0
    %v146 = vcvt.s32.f32 %v145
    %v147 = vlaneseq
    %v148 = vshrl.u32 %v147, 7
    %v149 = vsub.s32 0, %v148
    %v150 = vrot.slane %v146, %v149
    %152 = vbcast.lane.b32.xlu0 %v150, 256
    %v153 = vpop.permute.xlu0 %152
    %v154 = vlaneseq
    %v155 = vshrl.u32 %v154, 7
    %v156 = vsub.s32 1, %v155
    %v157 = vrot.slane %v146, %v156
    %159 = vbcast.lane.b32.xlu0 %v157, 256
    %v160 = vpop.permute.xlu0 %159
    %v161 = vlaneseq
    %v162 = vshrl.u32 %v161, 7
    %v163 = vsub.s32 2, %v162
    %v164 = vrot.slane %v146, %v163
    %166 = vbcast.lane.b32.xlu0 %v164, 256
    %v167 = vpop.permute.xlu0 %166
    %v168 = vlaneseq
    %v169 = vshrl.u32 %v168, 7
    %v170 = vsub.s32 3, %v169
    %v171 = vrot.slane %v146, %v170
    %173 = vbcast.lane.b32.xlu0 %v171, 256
    %v174 = vpop.permute.xlu0 %173
    %v175 = vlaneseq
    %v176 = vshrl.u32 %v175, 7
    %v177 = vsub.s32 4, %v176
    %v178 = vrot.slane %v146, %v177
    %180 = vbcast.lane.b32.xlu0 %v178, 256
    %v181 = vpop.permute.xlu0 %180
    %v182 = vlaneseq
    %v183 = vshrl.u32 %v182, 7
    %v184 = vsub.s32 5, %v183
    %v185 = vrot.slane %v146, %v184
    %187 = vbcast.lane.b32.xlu0 %v185, 256
    %v188 = vpop.permute.xlu0 %187
    %v189 = vlaneseq
    %v190 = vshrl.u32 %v189, 7
    %v191 = vsub.s32 6, %v190
    %v192 = vrot.slane %v146, %v191
    %194 = vbcast.lane.b32.xlu0 %v192, 256
    %v195 = vpop.permute.xlu0 %194
    %v196 = vlaneseq
    %v197 = vshrl.u32 %v196, 7
    %v198 = vsub.s32 7, %v197
    %v199 = vrot.slane %v146, %v198
    %201 = vbcast.lane.b32.xlu0 %v199, 256
    %v202 = vpop.permute.xlu0 %201
    %v203 = vmul.f32 %v153, %v136
    %v204 = vmul.f32 %v160, %v137
    %v205 = vmul.f32 %v167, %v138
    %v206 = vmul.f32 %v174, %v139
    %v207 = vmul.f32 %v181, %v140
    %v208 = vmul.f32 %v188, %v141
    %v209 = vmul.f32 %v195, %v142
    %v210 = vmul.f32 %v202, %v143
    %vm211 = vcmask 31744
    %v212 = vsel %vm211, %v203, 0.0
    %v213 = vrot.slane %v212, 4
    %v214 = vadd.f32 %v212, %v213
    %v215 = vrot.slane %v214, 2
    %v216 = vadd.f32 %v214, %v215
    %v217 = vrot.slane %v216, 1
    %v218 = vadd.f32 %v216, %v217
    %v219 = vsel %vm211, %v204, 0.0
    %v220 = vrot.slane %v219, 4
    %v221 = vadd.f32 %v219, %v220
    %v222 = vrot.slane %v221, 2
    %v223 = vadd.f32 %v221, %v222
    %v224 = vrot.slane %v223, 1
    %v225 = vadd.f32 %v223, %v224
    %v226 = vsel %vm211, %v205, 0.0
    %v227 = vrot.slane %v226, 4
    %v228 = vadd.f32 %v226, %v227
    %v229 = vrot.slane %v228, 2
    %v230 = vadd.f32 %v228, %v229
    %v231 = vrot.slane %v230, 1
    %v232 = vadd.f32 %v230, %v231
    %v233 = vsel %vm211, %v206, 0.0
    %v234 = vrot.slane %v233, 4
    %v235 = vadd.f32 %v233, %v234
    %v236 = vrot.slane %v235, 2
    %v237 = vadd.f32 %v235, %v236
    %v238 = vrot.slane %v237, 1
    %v239 = vadd.f32 %v237, %v238
    %v240 = vsel %vm211, %v207, 0.0
    %v241 = vrot.slane %v240, 4
    %v242 = vadd.f32 %v240, %v241
    %v243 = vrot.slane %v242, 2
    %v244 = vadd.f32 %v242, %v243
    %v245 = vrot.slane %v244, 1
    %v246 = vadd.f32 %v244, %v245
    %v247 = vsel %vm211, %v208, 0.0
    %v248 = vrot.slane %v247, 4
    %v249 = vadd.f32 %v247, %v248
    %v250 = vrot.slane %v249, 2
    %v251 = vadd.f32 %v249, %v250
    %v252 = vrot.slane %v251, 1
    %v253 = vadd.f32 %v251, %v252
    %v254 = vsel %vm211, %v209, 0.0
    %v255 = vrot.slane %v254, 4
    %v256 = vadd.f32 %v254, %v255
    %v257 = vrot.slane %v256, 2
    %v258 = vadd.f32 %v256, %v257
    %v259 = vrot.slane %v258, 1
    %v260 = vadd.f32 %v258, %v259
    %v261 = vsel %vm211, %v210, 0.0
    %v262 = vrot.slane %v261, 4
    %v263 = vadd.f32 %v261, %v262
    %v264 = vrot.slane %v263, 2
    %v265 = vadd.f32 %v263, %v264
    %v266 = vrot.slane %v265, 1
    %v267 = vadd.f32 %v265, %v266
    %vm268 = vcmp.eq.s32.totalorder %v54, %v135
    %v269 = vsel %vm268, 1, 0
    %v270 = vcvt.s32.f32 %v269
    %v271 = vlaneseq
    %v272 = vshrl.u32 %v271, 7
    %v273 = vsub.s32 0, %v272
    %v274 = vrot.slane %v270, %v273
    %276 = vbcast.lane.b32.xlu0 %v274, 256
    %v277 = vpop.permute.xlu0 %276
    %v278 = vlaneseq
    %v279 = vshrl.u32 %v278, 7
    %v280 = vsub.s32 1, %v279
    %v281 = vrot.slane %v270, %v280
    %283 = vbcast.lane.b32.xlu0 %v281, 256
    %v284 = vpop.permute.xlu0 %283
    %v285 = vlaneseq
    %v286 = vshrl.u32 %v285, 7
    %v287 = vsub.s32 2, %v286
    %v288 = vrot.slane %v270, %v287
    %290 = vbcast.lane.b32.xlu0 %v288, 256
    %v291 = vpop.permute.xlu0 %290
    %v292 = vlaneseq
    %v293 = vshrl.u32 %v292, 7
    %v294 = vsub.s32 3, %v293
    %v295 = vrot.slane %v270, %v294
    %297 = vbcast.lane.b32.xlu0 %v295, 256
    %v298 = vpop.permute.xlu0 %297
    %v299 = vlaneseq
    %v300 = vshrl.u32 %v299, 7
    %v301 = vsub.s32 4, %v300
    %v302 = vrot.slane %v270, %v301
    %304 = vbcast.lane.b32.xlu0 %v302, 256
    %v305 = vpop.permute.xlu0 %304
    %v306 = vlaneseq
    %v307 = vshrl.u32 %v306, 7
    %v308 = vsub.s32 5, %v307
    %v309 = vrot.slane %v270, %v308
    %311 = vbcast.lane.b32.xlu0 %v309, 256
    %v312 = vpop.permute.xlu0 %311
    %v313 = vlaneseq
    %v314 = vshrl.u32 %v313, 7
    %v315 = vsub.s32 6, %v314
    %v316 = vrot.slane %v270, %v315
    %318 = vbcast.lane.b32.xlu0 %v316, 256
    %v319 = vpop.permute.xlu0 %318
    %v320 = vlaneseq
    %v321 = vshrl.u32 %v320, 7
    %v322 = vsub.s32 7, %v321
    %v323 = vrot.slane %v270, %v322
    %325 = vbcast.lane.b32.xlu0 %v323, 256
    %v326 = vpop.permute.xlu0 %325
    %v327 = vmul.f32 %v277, %v136
    %v328 = vmul.f32 %v284, %v137
    %v329 = vmul.f32 %v291, %v138
    %v330 = vmul.f32 %v298, %v139
    %v331 = vmul.f32 %v305, %v140
    %v332 = vmul.f32 %v312, %v141
    %v333 = vmul.f32 %v319, %v142
    %v334 = vmul.f32 %v326, %v143
    %v335 = vsel %vm211, %v327, 0.0
    %v336 = vrot.slane %v335, 4
    %v337 = vadd.f32 %v335, %v336
    %v338 = vrot.slane %v337, 2
    %v339 = vadd.f32 %v337, %v338
    %v340 = vrot.slane %v339, 1
    %v341 = vadd.f32 %v339, %v340
    %v342 = vsel %vm211, %v328, 0.0
    %v343 = vrot.slane %v342, 4
    %v344 = vadd.f32 %v342, %v343
    %v345 = vrot.slane %v344, 2
    %v346 = vadd.f32 %v344, %v345
    %v347 = vrot.slane %v346, 1
    %v348 = vadd.f32 %v346, %v347
    %v349 = vsel %vm211, %v329, 0.0
    %v350 = vrot.slane %v349, 4
    %v351 = vadd.f32 %v349, %v350
    %v352 = vrot.slane %v351, 2
    %v353 = vadd.f32 %v351, %v352
    %v354 = vrot.slane %v353, 1
    %v355 = vadd.f32 %v353, %v354
    %v356 = vsel %vm211, %v330, 0.0
    %v357 = vrot.slane %v356, 4
    %v358 = vadd.f32 %v356, %v357
    %v359 = vrot.slane %v358, 2
    %v360 = vadd.f32 %v358, %v359
    %v361 = vrot.slane %v360, 1
    %v362 = vadd.f32 %v360, %v361
    %v363 = vsel %vm211, %v331, 0.0
    %v364 = vrot.slane %v363, 4
    %v365 = vadd.f32 %v363, %v364
    %v366 = vrot.slane %v365, 2
    %v367 = vadd.f32 %v365, %v366
    %v368 = vrot.slane %v367, 1
    %v369 = vadd.f32 %v367, %v368
    %v370 = vsel %vm211, %v332, 0.0
    %v371 = vrot.slane %v370, 4
    %v372 = vadd.f32 %v370, %v371
    %v373 = vrot.slane %v372, 2
    %v374 = vadd.f32 %v372, %v373
    %v375 = vrot.slane %v374, 1
    %v376 = vadd.f32 %v374, %v375
    %v377 = vsel %vm211, %v333, 0.0
    %v378 = vrot.slane %v377, 4
    %v379 = vadd.f32 %v377, %v378
    %v380 = vrot.slane %v379, 2
    %v381 = vadd.f32 %v379, %v380
    %v382 = vrot.slane %v381, 1
    %v383 = vadd.f32 %v381, %v382
    %v384 = vsel %vm211, %v334, 0.0
    %v385 = vrot.slane %v384, 4
    %v386 = vadd.f32 %v384, %v385
    %v387 = vrot.slane %v386, 2
    %v388 = vadd.f32 %v386, %v387
    %v389 = vrot.slane %v388, 1
    %v390 = vadd.f32 %v388, %v389
    %391 = vst.msk [vmem:[#allocation6] sm:$0xff] %vm49, %v82
    %392 = vst.msk [vmem:[#allocation7] sm:$0xff] %vm49, %v48
    %v393 = vcvt.s32.f32 %v71
    %v394 = vcvt.s32.f32 %v135
    %v395 = vmul.f32 %v52, 0.0
    %vm404 = vcmask 1041409
    %v405 = vsel %vm404, %v225, %v218
    %vm406 = vcmask 1042434
    %v407 = vsel %vm406, %v232, %v405
    %vm408 = vcmask 1043459
    %v409 = vsel %vm408, %v239, %v407
    %vm410 = vcmask 1044484
    %v411 = vsel %vm410, %v246, %v409
    %vm412 = vcmask 1045509
    %v413 = vsel %vm412, %v253, %v411
    %vm414 = vcmask 1046534
    %v415 = vsel %vm414, %v260, %v413
    %vm416 = vcmask 1047559
    %v417 = vsel %vm416, %v267, %v415
    %418 = vrot.lane.b32.xlu0 %v417, 3
    %v419 = vpop.permute.xlu0 %418
    %v429 = vsel %vm404, %v348, %v341
    %v430 = vsel %vm406, %v355, %v429
    %v431 = vsel %vm408, %v362, %v430
    %v432 = vsel %vm410, %v369, %v431
    %v433 = vsel %vm412, %v376, %v432
    %v434 = vsel %vm414, %v383, %v433
    %v435 = vsel %vm416, %v390, %v434
    %436 = vrot.lane.b32.xlu0 %v435, 7
    %v437 = vpop.permute.xlu0 %436
    %vm439 = vcmask 7168
    %v440 = vsel %vm439, %v52, %v393
    %vm441 = vcmask 15360
    %v442 = vsel %vm441, %v440, %v394
    %vm443 = vcmask 23552
    %v444 = vsel %vm443, %v442, %v419
    %vm445 = vcmask 56320
    %v446 = vsel %vm445, %v444, %v437
    %vm447 = vcmask 89088
    %v448 = vsel %vm447, %v446, %v395
    %449 = vst [vmem:[#allocation9] sm:$0xff] %v448
    // Predicated region
    $region26: #{tpu_custom_call.1} parent=1 // pred_check
      _
    $region27: #{tpu_custom_call.1} parent=1 // pred_check_branch
      %451 = sbr.rel (0) target = $region29
    $region28: #{tpu_custom_call.1} parent=1 // pred_region
      %s453 = ssub.s32 128, 128
      %454 = vsyncadd [#allocation4], %s453
      %s456 = sshll.u32 [#allocation6], 4
      %s457 = int_to_ptr.vmem [resolvable:$true] %s456
      %459 = dma.vmem_to_hbm [thread:$0]  %s457, 128, %s5, [#allocation4]
    $region29: #{tpu_custom_call.1} parent=1 // pred_fallthru
      _
    // Predicated region
    $region30: #{tpu_custom_call.1} parent=1 // pred_check
      _
    $region31: #{tpu_custom_call.1} parent=1 // pred_check_branch
      %461 = sbr.rel (0) target = $region33
    $region32: #{tpu_custom_call.1} parent=1 // pred_region
      %s463 = ssub.s32 128, 128
      %464 = vsyncadd [#allocation8], %s463
      %s466 = sshll.u32 [#allocation7], 4
      %s467 = int_to_ptr.vmem [resolvable:$true] %s466
      %469 = dma.vmem_to_hbm [thread:$0]  %s467, 128, %s6, [#allocation8]
    $region33: #{tpu_custom_call.1} parent=1 // pred_fallthru
      _
    // Predicated region
    $region34: #{tpu_custom_call.1} parent=1 // pred_check
      _
    $region35: #{tpu_custom_call.1} parent=1 // pred_check_branch
      %471 = sbr.rel (0) target = $region37
    $region36: #{tpu_custom_call.1} parent=1 // pred_region
      %s473 = ssub.s32 128, 128
      %474 = vsyncadd [#allocation8], %s473
      %s476 = sshll.u32 [#allocation9], 4
      %s477 = int_to_ptr.vmem [resolvable:$true] %s476
      %479 = dma.vmem_to_hbm [thread:$0]  %s477, 128, %s7, [#allocation8]
    $region37: #{tpu_custom_call.1} parent=1 // pred_fallthru
      _
    // Predicated region
    $region38: #{tpu_custom_call.1} parent=1 // pred_check
      _
    $region39: #{tpu_custom_call.1} parent=1 // pred_check_branch
      %481 = sbr.rel (0) target = $region41
    $region40: #{tpu_custom_call.1} parent=1 // pred_region
      %482 = dma.done [#allocation4], 128
    $region41: #{tpu_custom_call.1} parent=1 // pred_fallthru
      _
    // Predicated region
    $region42: #{tpu_custom_call.1} parent=1 // pred_check
      _
    $region43: #{tpu_custom_call.1} parent=1 // pred_check_branch
      %484 = sbr.rel (0) target = $region45
    $region44: #{tpu_custom_call.1} parent=1 // pred_region
      %485 = dma.done [#allocation8], 128
    $region45: #{tpu_custom_call.1} parent=1 // pred_fallthru
      _
    // Predicated region
    $region46: #{tpu_custom_call.1} parent=1 // pred_check
      _
    $region47: #{tpu_custom_call.1} parent=1 // pred_check_branch
      %487 = sbr.rel (0) target = $region49
    $region48: #{tpu_custom_call.1} parent=1 // pred_region
      %488 = dma.done [#allocation8], 128
    $region49: #{tpu_custom_call.1} parent=1 // pred_fallthru
      _
    %489 = vsyncpa [#allocation4], 1
    %490 = vsyncpa [#allocation8], 1
    %491 = vsyncpa [#allocation5], 1

</llo_original>
